<compile_context>
chip_gen: v7x
topology: tpu7x:2x2x1
jax: 0.10.0
libtpu: 0.0.40
codegen_flags: <defaults>
</compile_context>

<pallas_src>
import jax
import jax.numpy as jnp
from jax.experimental import pallas as pl
from jax.experimental.pallas import tpu as pltpu

_VMEM_SPEC = pl.BlockSpec(memory_space=pltpu.MemorySpace.VMEM)
_SMEM_SPEC = pl.BlockSpec(memory_space=pltpu.MemorySpace.SMEM)


# ---------------------------------------------------------------------------
# Single fused kernel for Triple_Loss.forward(input, D)
# ---------------------------------------------------------------------------
def _make_triple_loss_kernel(B, C, domain_num, margin):
    assert B % 2 == 0, "torch.chunk(input, 2) assumed to split evenly"
    H = B // 2
    inv_H = 1.0 / float(H)          # KLDivLoss(reduction='batchmean') divisor
    inv_DN = 1.0 / float(domain_num)

    def kernel(x_ref, d_ref, out_ref):
        x = x_ref[...].astype(jnp.float32)      # [B, C]  (upcast in-register)
        d = d_ref[...]                          # [B, 1]  int32
        posi, nega = x[:H], x[H:]
        dp, dn = d[:H], d[H:]

        def log_softmax(v):
            # one exp pass; z - log(sum exp z)
            m = jnp.max(v, axis=-1, keepdims=True)
            z = v - m
            s = jnp.sum(jnp.exp(z), axis=-1, keepdims=True)
            return z - jnp.log(s)

        def softmax_row(v):                      # v: [1, C]
            m = jnp.max(v, axis=-1, keepdims=True)
            e = jnp.exp(v - m)
            s = jnp.sum(e, axis=-1, keepdims=True)
            return e * pl.reciprocal(s, approx=True)   # EUP slot, VALU stays free

        def anchor_mean(v, dv):
            # mean over domains of softmax(scatter_mean(v, dv)) -- only the mean
            # of the anchor rows is ever consumed, so average directly (no concat).
            acc = jnp.zeros((1, C), jnp.float32)
            for dom in range(domain_num):
                msk = (dv == dom).astype(jnp.float32)                        # [H,1]
                ssum = jnp.sum(v * msk, axis=0, keepdims=True)               # [1,C]
                cnt = jnp.maximum(jnp.sum(msk, axis=0, keepdims=True), 1.0)  # [1,1]
                acc = acc + softmax_row(ssum / cnt)
            return acc * jnp.float32(inv_DN)                                 # [1,C]

        pa_mean = anchor_mean(posi, dp)          # [1, C]  (posi_anchor.mean(0))
        na_mean = anchor_mean(nega, dn)          # [1, C]  (nega_anchor.mean(0))
        log_pa = jnp.log(pa_mean)
        log_na = jnp.log(na_mean)

        # column sums of log-softmax of each half (the only way log_p enters KL)
        colsum_lsp = jnp.sum(log_softmax(posi), axis=0, keepdims=True)   # [1,C]
        colsum_lsn = jnp.sum(log_softmax(nega), axis=0, keepdims=True)   # [1,C]

        ent_p = jnp.sum(pa_mean * log_pa)        # sum_c t_c * log t_c
        ent_n = jnp.sum(na_mean * log_na)

        ih = jnp.float32(inv_H)
        # KLDivLoss(batchmean)(log_p, t broadcast over H rows)
        kl_sp_pa = ent_p - ih * jnp.sum(pa_mean * colsum_lsp)
        kl_sp_na = ent_n - ih * jnp.sum(na_mean * colsum_lsp)
        kl_sn_na = ent_n - ih * jnp.sum(na_mean * colsum_lsn)
        kl_sn_pa = ent_p - ih * jnp.sum(pa_mean * colsum_lsn)

        mgn = jnp.float32(margin)
        loss_d = (jnp.maximum(mgn + kl_sp_pa - kl_sp_na, 0.0)
                  + jnp.maximum(mgn + kl_sn_na - kl_sn_pa, 0.0))
        out_ref[0] = loss_d

    return kernel


def triple_loss_pallas(inp, D, *, margin=0.5, domain_num=2):
    """Pallas equivalent of Triple_Loss(margin, domain_num).forward(inp, D)."""
    B, C = inp.shape
    kernel = _make_triple_loss_kernel(B, C, domain_num, margin)
    out = pl.pallas_call(
        kernel,
        out_shape=jax.ShapeDtypeStruct((1,), jnp.float32),
        in_specs=[_VMEM_SPEC, _VMEM_SPEC],
        out_specs=_SMEM_SPEC,
    )(inp, D.astype(jnp.int32).reshape(B, 1))
    return out[0]


# ---------------------------------------------------------------------------
# Pure-JAX reference for validation
# ---------------------------------------------------------------------------
def _ref_triple_loss(inp, D, *, margin, domain_num):
    B, C = inp.shape
    H = B // 2
    posi, nega = inp[:H].astype(jnp.float32), inp[H:].astype(jnp.float32)
    dp, dn = D[:H], D[H:]

    def scatter_mean(v, dv):
        rows = []
        for dom in range(domain_num):
            m = (dv == dom).astype(jnp.float32)[:, None]
            s = jnp.sum(v * m, axis=0, keepdims=True)
            c = jnp.maximum(jnp.sum(m), 1.0)
            rows.append(s / c)
        return jnp.concatenate(rows, axis=0)

    pa = jax.nn.softmax(scatter_mean(posi, dp), axis=-1)
    na = jax.nn.softmax(scatter_mean(nega, dn), axis=-1)
    log_sp = jnp.log(jax.nn.softmax(posi, axis=-1))
    log_sn = jnp.log(jax.nn.softmax(nega, axis=-1))

    def kl(log_p, t):
        return jnp.sum(t * (jnp.log(t) - log_p)) / log_p.shape[0]

    pp = jnp.broadcast_to(jnp.mean(pa, axis=0, keepdims=True), log_sp.shape)
    np_ = jnp.broadcast_to(jnp.mean(na, axis=0, keepdims=True), log_sp.shape)
    nn_ = jnp.broadcast_to(jnp.mean(na, axis=0, keepdims=True), log_sn.shape)
    pn = jnp.broadcast_to(jnp.mean(pa, axis=0, keepdims=True), log_sn.shape)

    loss_d = (jax.nn.relu(margin + kl(log_sp, pp) - kl(log_sp, np_))
              + jax.nn.relu(margin + kl(log_sn, nn_) - kl(log_sn, pn)))
    return loss_d


if __name__ == "__main__":
    key = jax.random.PRNGKey(0)
    B, C = 8, 16
    MARGIN, DOMAIN_NUM = 0.5, 2

    k0, _ = jax.random.split(key)
    x = jax.random.normal(k0, (B, C), jnp.float32)

    # case 1: both halves contain both domains
    D1 = jnp.array([0, 1, 0, 1, 1, 0, 1, 0], jnp.int32)
    # case 2: one half misses a domain -> exercises scatter_mean's empty-group path
    D2 = jnp.array([0, 0, 0, 0, 1, 1, 1, 1], jnp.int32)

    for D in (D1, D2):
        out = jax.block_until_ready(
            triple_loss_pallas(x, D, margin=MARGIN, domain_num=DOMAIN_NUM))
        ref = jax.block_until_ready(
            _ref_triple_loss(x, D, margin=MARGIN, domain_num=DOMAIN_NUM))
        assert jnp.isfinite(out), "non-finite kernel output"
        assert jnp.allclose(out, ref, rtol=2e-3, atol=1e-3), (out, ref)

    print("KERNEL_OK")
</pallas_src>

<mosaic_0001>
module attributes {stable_mosaic.version = 11 : i64} {
  func.func @kernel(%arg0: memref<8x16xf32, #tpu.memory_space<vmem>>, %arg1: memref<8x1xi32, #tpu.memory_space<vmem>>, %arg2: memref<1xf32, #tpu.memory_space<smem>>) attributes {dimension_semantics = [], scalar_prefetch = 0 : i64, scratch_operands = 0 : i64, tpu.core_type = #tpu.core_type<tc>} {
    %c0 = arith.constant 0 : index
    %c0_0 = arith.constant 0 : index
    %0 = vector.load %arg0[%c0, %c0_0] : memref<8x16xf32, #tpu.memory_space<vmem>>, vector<8x16xf32>
    %c0_1 = arith.constant 0 : index
    %c0_2 = arith.constant 0 : index
    %1 = vector.load %arg1[%c0_1, %c0_2] : memref<8x1xi32, #tpu.memory_space<vmem>>, vector<8x1xi32>
    %2 = vector.extract_strided_slice %0 {offsets = [0, 0], sizes = [4, 16], strides = [1, 1]} : vector<8x16xf32> to vector<4x16xf32>
    %3 = vector.extract_strided_slice %0 {offsets = [4, 0], sizes = [4, 16], strides = [1, 1]} : vector<8x16xf32> to vector<4x16xf32>
    %4 = vector.extract_strided_slice %1 {offsets = [0, 0], sizes = [4, 1], strides = [1, 1]} : vector<8x1xi32> to vector<4x1xi32>
    %5 = vector.extract_strided_slice %1 {offsets = [4, 0], sizes = [4, 1], strides = [1, 1]} : vector<8x1xi32> to vector<4x1xi32>
    %cst = arith.constant 0.000000e+00 : f32
    %6 = vector.broadcast %cst : f32 to vector<1x16xf32>
    %c0_i32 = arith.constant 0 : i32
    %7 = vector.broadcast %c0_i32 : i32 to vector<4x1xi32>
    %8 = arith.cmpi eq, %4, %7 : vector<4x1xi32>
    %9 = arith.extui %8 : vector<4x1xi1> to vector<4x1xi32>
    %10 = arith.sitofp %9 : vector<4x1xi32> to vector<4x1xf32>
    %11 = vector.broadcast %10 : vector<4x1xf32> to vector<4x16xf32>
    %12 = arith.mulf %2, %11 : vector<4x16xf32>
    %cst_3 = arith.constant dense<0.000000e+00> : vector<16xf32>
    %13 = vector.multi_reduction <add>, %12, %cst_3 [0] : vector<4x16xf32> to vector<16xf32>
    %14 = vector.shape_cast %13 : vector<16xf32> to vector<1x16xf32>
    %cst_4 = arith.constant dense<0.000000e+00> : vector<1xf32>
    %15 = vector.multi_reduction <add>, %10, %cst_4 [0] : vector<4x1xf32> to vector<1xf32>
    %16 = vector.shape_cast %15 : vector<1xf32> to vector<1x1xf32>
    %cst_5 = arith.constant 1.000000e+00 : f32
    %17 = vector.broadcast %cst_5 : f32 to vector<1x1xf32>
    %18 = arith.maximumf %16, %17 : vector<1x1xf32>
    %19 = vector.broadcast %18 : vector<1x1xf32> to vector<1x16xf32>
    %20 = arith.divf %14, %19 : vector<1x16xf32>
    %cst_6 = arith.constant dense<0xFF800000> : vector<1xf32>
    %21 = vector.multi_reduction <maximumf>, %20, %cst_6 [1] : vector<1x16xf32> to vector<1xf32>
    %22 = vector.shape_cast %21 : vector<1xf32> to vector<1x1xf32>
    %23 = vector.broadcast %22 : vector<1x1xf32> to vector<1x16xf32>
    %24 = arith.subf %20, %23 : vector<1x16xf32>
    %25 = math.exp %24 : vector<1x16xf32>
    %cst_7 = arith.constant dense<0.000000e+00> : vector<1xf32>
    %26 = vector.multi_reduction <add>, %25, %cst_7 [1] : vector<1x16xf32> to vector<1xf32>
    %27 = vector.shape_cast %26 : vector<1xf32> to vector<1x1xf32>
    %28 = tpu.reciprocal %27 {approx = true} : vector<1x1xf32> -> vector<1x1xf32>
    %29 = vector.broadcast %28 : vector<1x1xf32> to vector<1x16xf32>
    %30 = arith.mulf %25, %29 : vector<1x16xf32>
    %31 = arith.addf %6, %30 : vector<1x16xf32>
    %c1_i32 = arith.constant 1 : i32
    %32 = vector.broadcast %c1_i32 : i32 to vector<4x1xi32>
    %33 = arith.cmpi eq, %4, %32 : vector<4x1xi32>
    %34 = arith.extui %33 : vector<4x1xi1> to vector<4x1xi32>
    %35 = arith.sitofp %34 : vector<4x1xi32> to vector<4x1xf32>
    %36 = vector.broadcast %35 : vector<4x1xf32> to vector<4x16xf32>
    %37 = arith.mulf %2, %36 : vector<4x16xf32>
    %cst_8 = arith.constant dense<0.000000e+00> : vector<16xf32>
    %38 = vector.multi_reduction <add>, %37, %cst_8 [0] : vector<4x16xf32> to vector<16xf32>
    %39 = vector.shape_cast %38 : vector<16xf32> to vector<1x16xf32>
    %cst_9 = arith.constant dense<0.000000e+00> : vector<1xf32>
    %40 = vector.multi_reduction <add>, %35, %cst_9 [0] : vector<4x1xf32> to vector<1xf32>
    %41 = vector.shape_cast %40 : vector<1xf32> to vector<1x1xf32>
    %cst_10 = arith.constant 1.000000e+00 : f32
    %42 = vector.broadcast %cst_10 : f32 to vector<1x1xf32>
    %43 = arith.maximumf %41, %42 : vector<1x1xf32>
    %44 = vector.broadcast %43 : vector<1x1xf32> to vector<1x16xf32>
    %45 = arith.divf %39, %44 : vector<1x16xf32>
    %cst_11 = arith.constant dense<0xFF800000> : vector<1xf32>
    %46 = vector.multi_reduction <maximumf>, %45, %cst_11 [1] : vector<1x16xf32> to vector<1xf32>
    %47 = vector.shape_cast %46 : vector<1xf32> to vector<1x1xf32>
    %48 = vector.broadcast %47 : vector<1x1xf32> to vector<1x16xf32>
    %49 = arith.subf %45, %48 : vector<1x16xf32>
    %50 = math.exp %49 : vector<1x16xf32>
    %cst_12 = arith.constant dense<0.000000e+00> : vector<1xf32>
    %51 = vector.multi_reduction <add>, %50, %cst_12 [1] : vector<1x16xf32> to vector<1xf32>
    %52 = vector.shape_cast %51 : vector<1xf32> to vector<1x1xf32>
    %53 = tpu.reciprocal %52 {approx = true} : vector<1x1xf32> -> vector<1x1xf32>
    %54 = vector.broadcast %53 : vector<1x1xf32> to vector<1x16xf32>
    %55 = arith.mulf %50, %54 : vector<1x16xf32>
    %56 = arith.addf %31, %55 : vector<1x16xf32>
    %cst_13 = arith.constant 5.000000e-01 : f32
    %57 = vector.broadcast %cst_13 : f32 to vector<1x16xf32>
    %58 = arith.mulf %56, %57 : vector<1x16xf32>
    %cst_14 = arith.constant 0.000000e+00 : f32
    %59 = vector.broadcast %cst_14 : f32 to vector<1x16xf32>
    %c0_i32_15 = arith.constant 0 : i32
    %60 = vector.broadcast %c0_i32_15 : i32 to vector<4x1xi32>
    %61 = arith.cmpi eq, %5, %60 : vector<4x1xi32>
    %62 = arith.extui %61 : vector<4x1xi1> to vector<4x1xi32>
    %63 = arith.sitofp %62 : vector<4x1xi32> to vector<4x1xf32>
    %64 = vector.broadcast %63 : vector<4x1xf32> to vector<4x16xf32>
    %65 = arith.mulf %3, %64 : vector<4x16xf32>
    %cst_16 = arith.constant dense<0.000000e+00> : vector<16xf32>
    %66 = vector.multi_reduction <add>, %65, %cst_16 [0] : vector<4x16xf32> to vector<16xf32>
    %67 = vector.shape_cast %66 : vector<16xf32> to vector<1x16xf32>
    %cst_17 = arith.constant dense<0.000000e+00> : vector<1xf32>
    %68 = vector.multi_reduction <add>, %63, %cst_17 [0] : vector<4x1xf32> to vector<1xf32>
    %69 = vector.shape_cast %68 : vector<1xf32> to vector<1x1xf32>
    %cst_18 = arith.constant 1.000000e+00 : f32
    %70 = vector.broadcast %cst_18 : f32 to vector<1x1xf32>
    %71 = arith.maximumf %69, %70 : vector<1x1xf32>
    %72 = vector.broadcast %71 : vector<1x1xf32> to vector<1x16xf32>
    %73 = arith.divf %67, %72 : vector<1x16xf32>
    %cst_19 = arith.constant dense<0xFF800000> : vector<1xf32>
    %74 = vector.multi_reduction <maximumf>, %73, %cst_19 [1] : vector<1x16xf32> to vector<1xf32>
    %75 = vector.shape_cast %74 : vector<1xf32> to vector<1x1xf32>
    %76 = vector.broadcast %75 : vector<1x1xf32> to vector<1x16xf32>
    %77 = arith.subf %73, %76 : vector<1x16xf32>
    %78 = math.exp %77 : vector<1x16xf32>
    %cst_20 = arith.constant dense<0.000000e+00> : vector<1xf32>
    %79 = vector.multi_reduction <add>, %78, %cst_20 [1] : vector<1x16xf32> to vector<1xf32>
    %80 = vector.shape_cast %79 : vector<1xf32> to vector<1x1xf32>
    %81 = tpu.reciprocal %80 {approx = true} : vector<1x1xf32> -> vector<1x1xf32>
    %82 = vector.broadcast %81 : vector<1x1xf32> to vector<1x16xf32>
    %83 = arith.mulf %78, %82 : vector<1x16xf32>
    %84 = arith.addf %59, %83 : vector<1x16xf32>
    %c1_i32_21 = arith.constant 1 : i32
    %85 = vector.broadcast %c1_i32_21 : i32 to vector<4x1xi32>
    %86 = arith.cmpi eq, %5, %85 : vector<4x1xi32>
    %87 = arith.extui %86 : vector<4x1xi1> to vector<4x1xi32>
    %88 = arith.sitofp %87 : vector<4x1xi32> to vector<4x1xf32>
    %89 = vector.broadcast %88 : vector<4x1xf32> to vector<4x16xf32>
    %90 = arith.mulf %3, %89 : vector<4x16xf32>
    %cst_22 = arith.constant dense<0.000000e+00> : vector<16xf32>
    %91 = vector.multi_reduction <add>, %90, %cst_22 [0] : vector<4x16xf32> to vector<16xf32>
    %92 = vector.shape_cast %91 : vector<16xf32> to vector<1x16xf32>
    %cst_23 = arith.constant dense<0.000000e+00> : vector<1xf32>
    %93 = vector.multi_reduction <add>, %88, %cst_23 [0] : vector<4x1xf32> to vector<1xf32>
    %94 = vector.shape_cast %93 : vector<1xf32> to vector<1x1xf32>
    %cst_24 = arith.constant 1.000000e+00 : f32
    %95 = vector.broadcast %cst_24 : f32 to vector<1x1xf32>
    %96 = arith.maximumf %94, %95 : vector<1x1xf32>
    %97 = vector.broadcast %96 : vector<1x1xf32> to vector<1x16xf32>
    %98 = arith.divf %92, %97 : vector<1x16xf32>
    %cst_25 = arith.constant dense<0xFF800000> : vector<1xf32>
    %99 = vector.multi_reduction <maximumf>, %98, %cst_25 [1] : vector<1x16xf32> to vector<1xf32>
    %100 = vector.shape_cast %99 : vector<1xf32> to vector<1x1xf32>
    %101 = vector.broadcast %100 : vector<1x1xf32> to vector<1x16xf32>
    %102 = arith.subf %98, %101 : vector<1x16xf32>
    %103 = math.exp %102 : vector<1x16xf32>
    %cst_26 = arith.constant dense<0.000000e+00> : vector<1xf32>
    %104 = vector.multi_reduction <add>, %103, %cst_26 [1] : vector<1x16xf32> to vector<1xf32>
    %105 = vector.shape_cast %104 : vector<1xf32> to vector<1x1xf32>
    %106 = tpu.reciprocal %105 {approx = true} : vector<1x1xf32> -> vector<1x1xf32>
    %107 = vector.broadcast %106 : vector<1x1xf32> to vector<1x16xf32>
    %108 = arith.mulf %103, %107 : vector<1x16xf32>
    %109 = arith.addf %84, %108 : vector<1x16xf32>
    %cst_27 = arith.constant 5.000000e-01 : f32
    %110 = vector.broadcast %cst_27 : f32 to vector<1x16xf32>
    %111 = arith.mulf %109, %110 : vector<1x16xf32>
    %112 = math.log %58 : vector<1x16xf32>
    %113 = math.log %111 : vector<1x16xf32>
    %cst_28 = arith.constant dense<0xFF800000> : vector<4xf32>
    %114 = vector.multi_reduction <maximumf>, %2, %cst_28 [1] : vector<4x16xf32> to vector<4xf32>
    %115 = vector.shape_cast %114 : vector<4xf32> to vector<4x1xf32>
    %116 = vector.broadcast %115 : vector<4x1xf32> to vector<4x16xf32>
    %117 = arith.subf %2, %116 : vector<4x16xf32>
    %118 = math.exp %117 : vector<4x16xf32>
    %cst_29 = arith.constant dense<0.000000e+00> : vector<4xf32>
    %119 = vector.multi_reduction <add>, %118, %cst_29 [1] : vector<4x16xf32> to vector<4xf32>
    %120 = vector.shape_cast %119 : vector<4xf32> to vector<4x1xf32>
    %121 = math.log %120 : vector<4x1xf32>
    %122 = vector.broadcast %121 : vector<4x1xf32> to vector<4x16xf32>
    %123 = arith.subf %117, %122 : vector<4x16xf32>
    %cst_30 = arith.constant dense<0.000000e+00> : vector<16xf32>
    %124 = vector.multi_reduction <add>, %123, %cst_30 [0] : vector<4x16xf32> to vector<16xf32>
    %125 = vector.shape_cast %124 : vector<16xf32> to vector<1x16xf32>
    %cst_31 = arith.constant dense<0xFF800000> : vector<4xf32>
    %126 = vector.multi_reduction <maximumf>, %3, %cst_31 [1] : vector<4x16xf32> to vector<4xf32>
    %127 = vector.shape_cast %126 : vector<4xf32> to vector<4x1xf32>
    %128 = vector.broadcast %127 : vector<4x1xf32> to vector<4x16xf32>
    %129 = arith.subf %3, %128 : vector<4x16xf32>
    %130 = math.exp %129 : vector<4x16xf32>
    %cst_32 = arith.constant dense<0.000000e+00> : vector<4xf32>
    %131 = vector.multi_reduction <add>, %130, %cst_32 [1] : vector<4x16xf32> to vector<4xf32>
    %132 = vector.shape_cast %131 : vector<4xf32> to vector<4x1xf32>
    %133 = math.log %132 : vector<4x1xf32>
    %134 = vector.broadcast %133 : vector<4x1xf32> to vector<4x16xf32>
    %135 = arith.subf %129, %134 : vector<4x16xf32>
    %cst_33 = arith.constant dense<0.000000e+00> : vector<16xf32>
    %136 = vector.multi_reduction <add>, %135, %cst_33 [0] : vector<4x16xf32> to vector<16xf32>
    %137 = vector.shape_cast %136 : vector<16xf32> to vector<1x16xf32>
    %138 = arith.mulf %58, %112 : vector<1x16xf32>
    %139 = vector.shape_cast %138 : vector<1x16xf32> to vector<1x1x16xf32>
    %cst_34 = arith.constant dense<0.000000e+00> : vector<1xf32>
    %140 = vector.multi_reduction <add>, %139, %cst_34 [1, 2] : vector<1x1x16xf32> to vector<1xf32>
    %141 = vector.shape_cast %140 : vector<1xf32> to vector<1x1x1xf32>
    %142 = vector.extract %141[0, 0, 0] : f32 from vector<1x1x1xf32>
    %143 = arith.mulf %111, %113 : vector<1x16xf32>
    %144 = vector.shape_cast %143 : vector<1x16xf32> to vector<1x1x16xf32>
    %cst_35 = arith.constant dense<0.000000e+00> : vector<1xf32>
    %145 = vector.multi_reduction <add>, %144, %cst_35 [1, 2] : vector<1x1x16xf32> to vector<1xf32>
    %146 = vector.shape_cast %145 : vector<1xf32> to vector<1x1x1xf32>
    %147 = vector.extract %146[0, 0, 0] : f32 from vector<1x1x1xf32>
    %148 = arith.mulf %58, %125 : vector<1x16xf32>
    %149 = vector.shape_cast %148 : vector<1x16xf32> to vector<1x1x16xf32>
    %cst_36 = arith.constant dense<0.000000e+00> : vector<1xf32>
    %150 = vector.multi_reduction <add>, %149, %cst_36 [1, 2] : vector<1x1x16xf32> to vector<1xf32>
    %151 = vector.shape_cast %150 : vector<1xf32> to vector<1x1x1xf32>
    %152 = vector.extract %151[0, 0, 0] : f32 from vector<1x1x1xf32>
    %cst_37 = arith.constant 2.500000e-01 : f32
    %153 = arith.mulf %cst_37, %152 : f32
    %154 = arith.subf %142, %153 : f32
    %155 = arith.mulf %111, %125 : vector<1x16xf32>
    %156 = vector.shape_cast %155 : vector<1x16xf32> to vector<1x1x16xf32>
    %cst_38 = arith.constant dense<0.000000e+00> : vector<1xf32>
    %157 = vector.multi_reduction <add>, %156, %cst_38 [1, 2] : vector<1x1x16xf32> to vector<1xf32>
    %158 = vector.shape_cast %157 : vector<1xf32> to vector<1x1x1xf32>
    %159 = vector.extract %158[0, 0, 0] : f32 from vector<1x1x1xf32>
    %cst_39 = arith.constant 2.500000e-01 : f32
    %160 = arith.mulf %cst_39, %159 : f32
    %161 = arith.subf %147, %160 : f32
    %162 = arith.mulf %111, %137 : vector<1x16xf32>
    %163 = vector.shape_cast %162 : vector<1x16xf32> to vector<1x1x16xf32>
    %cst_40 = arith.constant dense<0.000000e+00> : vector<1xf32>
    %164 = vector.multi_reduction <add>, %163, %cst_40 [1, 2] : vector<1x1x16xf32> to vector<1xf32>
    %165 = vector.shape_cast %164 : vector<1xf32> to vector<1x1x1xf32>
    %166 = vector.extract %165[0, 0, 0] : f32 from vector<1x1x1xf32>
    %cst_41 = arith.constant 2.500000e-01 : f32
    %167 = arith.mulf %cst_41, %166 : f32
    %168 = arith.subf %147, %167 : f32
    %169 = arith.mulf %58, %137 : vector<1x16xf32>
    %170 = vector.shape_cast %169 : vector<1x16xf32> to vector<1x1x16xf32>
    %cst_42 = arith.constant dense<0.000000e+00> : vector<1xf32>
    %171 = vector.multi_reduction <add>, %170, %cst_42 [1, 2] : vector<1x1x16xf32> to vector<1xf32>
    %172 = vector.shape_cast %171 : vector<1xf32> to vector<1x1x1xf32>
    %173 = vector.extract %172[0, 0, 0] : f32 from vector<1x1x1xf32>
    %cst_43 = arith.constant 2.500000e-01 : f32
    %174 = arith.mulf %cst_43, %173 : f32
    %175 = arith.subf %142, %174 : f32
    %cst_44 = arith.constant 5.000000e-01 : f32
    %176 = arith.addf %cst_44, %154 : f32
    %177 = arith.subf %176, %161 : f32
    %cst_45 = arith.constant 0.000000e+00 : f32
    %178 = arith.maximumf %177, %cst_45 : f32
    %cst_46 = arith.constant 5.000000e-01 : f32
    %179 = arith.addf %cst_46, %168 : f32
    %180 = arith.subf %179, %175 : f32
    %cst_47 = arith.constant 0.000000e+00 : f32
    %181 = arith.maximumf %180, %cst_47 : f32
    %182 = arith.addf %178, %181 : f32
    %c0_48 = arith.constant 0 : index
    %183 = memref.load %arg2[%c0_48] : memref<1xf32, #tpu.memory_space<smem>>
    memref.store %182, %arg2[%c0_48] : memref<1xf32, #tpu.memory_space<smem>>
    return
  }
}

</mosaic_0001>

<llo_original>
// kernel: tpu_custom_call.1
$region0: #{tpu_custom_call.1}
  #allocation0 [shape = 'u32[]', space=smem, size = 0x4, offset = 0x4, fixed_abs, tag = 'smem constant byte address 0x4 - core index']
  #allocation1 [shape = 'u32[144,128]{1,0:T(1,128)}', space=vmem, size = 0x12000, scoped, tag = 'internal scratch']
  %s0 = inlined_call_operand.vmem [shape: f32[8,16], index: 0, kind: input, shape index: {}]
  %s1 = inlined_call_operand.vmem [shape: s32[8,1], index: 1, kind: input, shape index: {}]
  %s2 = inlined_call_operand.hbm [shape: f32[1], index: 2, kind: output, shape index: {}]
  %s3 = sld [smem:[#allocation0]]
  $region18: #{tpu_custom_call.1} parent=0
    _
  %s5 = ssub.s32 1, %s3
  %s6 = scalar_select 0, %s5, %s3
  $region1: #{tpu_custom_call.1} parent=0
    #allocation2 [shape = 'u8[512]{0}', space=smem, size = 0x200, scoped, tag = 'output window, operand 0, single buffered']
    #allocation3 [shape = 's32[1]{0}', space=sflag, size = 0x4, scoped, tag = 'scoped memory for tpu_custom_call.1']
    %7 = vsyncpa [#allocation3], 0
    // Predicated region
    $region2: #{tpu_custom_call.1} parent=1 // pred_check
      _
    $region3: #{tpu_custom_call.1} parent=1 // pred_check_branch
      %9 = sbr.rel (0) target = $region5
    $region4: #{tpu_custom_call.1} parent=1 // pred_region
      _
    $region5: #{tpu_custom_call.1} parent=1 // pred_fallthru
      _
    // Predicated region
    $region6: #{tpu_custom_call.1} parent=1 // pred_check
      _
    $region7: #{tpu_custom_call.1} parent=1 // pred_check_branch
      %11 = sbr.rel (0) target = $region9
    $region8: #{tpu_custom_call.1} parent=1 // pred_region
      _
    $region9: #{tpu_custom_call.1} parent=1 // pred_fallthru
      _
    %v12 = vld [vmem:[%s0] sm:$0xff]
    %v13 = vld [vmem:[%s1] sm:$0xff]
    %vm14 = vcmp.eq.s32.totalorder %v13, 0
    %v15 = vsel %vm14, 1, 0
    %v16 = vcvt.s32.f32 %v15
    %18 = vset.pattern.permute.xlu0 0
    %19 = vperm.xlu0 %18, %v16
    %v20 = vpop.permute.xlu0 %19
    %v22 = vmul.f32 %v12, %v20
    %vm23 = vcmask 125952
    %v24 = vsel %vm23, %v22, 0.0
    %v25 = vrot.slane %v24, 4
    %v26 = vadd.f32 %v24, %v25
    %v27 = vrot.slane %v26, 2
    %v28 = vadd.f32 %v26, %v27
    %v29 = vrot.slane %v28, 1
    %v30 = vadd.f32 %v28, %v29
    %vm31 = vcmask 3072
    %v32 = vsel %vm31, %v16, 0.0
    %v33 = vrot.slane %v32, 4
    %v34 = vadd.f32 %v32, %v33
    %v35 = vrot.slane %v34, 2
    %v36 = vadd.f32 %v34, %v35
    %v37 = vrot.slane %v36, 1
    %v38 = vadd.f32 %v36, %v37
    %v39 = vmax.f32 %v38, 1.0
    %41 = vset.pattern.permute.xlu0 0
    %42 = vperm.xlu0 %41, %v39
    %v43 = vpop.permute.xlu0 %42
    %v45 = vrcp.pop %v43
    %v46 = vmul.f32 %v30, %v45
    %vm47 = vcmask 130048
    %v48 = vsel %vm47, %v46, -inf
    %49 = vmax.xlane.f32.xlu0 %v48
    %v50 = vpop.xlane.xlu0 %49
    %v51 = vsub.f32 %v46, %v50
    %v52 = vmul.f32 %v51, 1.442695
    %v53 = vpow.pop %v52
    %v54 = vsel %vm47, %v53, 0.0
    %55 = vadd.xlane.f32.xlu0 %v54
    %v56 = vpop.xlane.xlu0 %55
    %v57 = vrcp.pop %v56
    %v58 = vmul.f32 %v53, %v57
    %v59 = vadd.f32 %v58, 0.0
    %vm60 = vcmp.eq.s32.totalorder %v13, 1
    %v61 = vsel %vm60, 1, 0
    %v62 = vcvt.s32.f32 %v61
    %64 = vset.pattern.permute.xlu0 0
    %65 = vperm.xlu0 %64, %v62
    %v66 = vpop.permute.xlu0 %65
    %v68 = vmul.f32 %v12, %v66
    %v69 = vsel %vm23, %v68, 0.0
    %v70 = vrot.slane %v69, 4
    %v71 = vadd.f32 %v69, %v70
    %v72 = vrot.slane %v71, 2
    %v73 = vadd.f32 %v71, %v72
    %v74 = vrot.slane %v73, 1
    %v75 = vadd.f32 %v73, %v74
    %v76 = vsel %vm31, %v62, 0.0
    %v77 = vrot.slane %v76, 4
    %v78 = vadd.f32 %v76, %v77
    %v79 = vrot.slane %v78, 2
    %v80 = vadd.f32 %v78, %v79
    %v81 = vrot.slane %v80, 1
    %v82 = vadd.f32 %v80, %v81
    %v83 = vmax.f32 %v82, 1.0
    %85 = vset.pattern.permute.xlu0 0
    %86 = vperm.xlu0 %85, %v83
    %v87 = vpop.permute.xlu0 %86
    %v89 = vrcp.pop %v87
    %v90 = vmul.f32 %v75, %v89
    %v91 = vsel %vm47, %v90, -inf
    %92 = vmax.xlane.f32.xlu0 %v91
    %v93 = vpop.xlane.xlu0 %92
    %v94 = vsub.f32 %v90, %v93
    %v95 = vmul.f32 %v94, 1.442695
    %v96 = vpow.pop %v95
    %v97 = vsel %vm47, %v96, 0.0
    %98 = vadd.xlane.f32.xlu0 %v97
    %v99 = vpop.xlane.xlu0 %98
    %v100 = vrcp.pop %v99
    %v101 = vmul.f32 %v96, %v100
    %v102 = vadd.f32 %v59, %v101
    %v103 = vmul.f32 %v102, 0.5
    %v105 = vrot.slane %v22, 4
    %v107 = vsel %vm23, %v105, 0.0
    %v108 = vrot.slane %v107, 4
    %v109 = vadd.f32 %v107, %v108
    %v110 = vrot.slane %v109, 2
    %v111 = vadd.f32 %v109, %v110
    %v112 = vrot.slane %v111, 1
    %v113 = vadd.f32 %v111, %v112
    %v114 = vrot.slane %v16, 4
    %v116 = vsel %vm31, %v114, 0.0
    %v117 = vrot.slane %v116, 4
    %v118 = vadd.f32 %v116, %v117
    %v119 = vrot.slane %v118, 2
    %v120 = vadd.f32 %v118, %v119
    %v121 = vrot.slane %v120, 1
    %v122 = vadd.f32 %v120, %v121
    %v123 = vmax.f32 %v122, 1.0
    %125 = vset.pattern.permute.xlu0 0
    %126 = vperm.xlu0 %125, %v123
    %v127 = vpop.permute.xlu0 %126
    %v129 = vrcp.pop %v127
    %v130 = vmul.f32 %v113, %v129
    %v131 = vsel %vm47, %v130, -inf
    %132 = vmax.xlane.f32.xlu0 %v131
    %v133 = vpop.xlane.xlu0 %132
    %v134 = vsub.f32 %v130, %v133
    %v135 = vmul.f32 %v134, 1.442695
    %v136 = vpow.pop %v135
    %v137 = vsel %vm47, %v136, 0.0
    %138 = vadd.xlane.f32.xlu0 %v137
    %v139 = vpop.xlane.xlu0 %138
    %v140 = vrcp.pop %v139
    %v141 = vmul.f32 %v136, %v140
    %v142 = vadd.f32 %v141, 0.0
    %v144 = vrot.slane %v68, 4
    %v146 = vsel %vm23, %v144, 0.0
    %v147 = vrot.slane %v146, 4
    %v148 = vadd.f32 %v146, %v147
    %v149 = vrot.slane %v148, 2
    %v150 = vadd.f32 %v148, %v149
    %v151 = vrot.slane %v150, 1
    %v152 = vadd.f32 %v150, %v151
    %v153 = vrot.slane %v62, 4
    %v155 = vsel %vm31, %v153, 0.0
    %v156 = vrot.slane %v155, 4
    %v157 = vadd.f32 %v155, %v156
    %v158 = vrot.slane %v157, 2
    %v159 = vadd.f32 %v157, %v158
    %v160 = vrot.slane %v159, 1
    %v161 = vadd.f32 %v159, %v160
    %v162 = vmax.f32 %v161, 1.0
    %164 = vset.pattern.permute.xlu0 0
    %165 = vperm.xlu0 %164, %v162
    %v166 = vpop.permute.xlu0 %165
    %v168 = vrcp.pop %v166
    %v169 = vmul.f32 %v152, %v168
    %v170 = vsel %vm47, %v169, -inf
    %171 = vmax.xlane.f32.xlu0 %v170
    %v172 = vpop.xlane.xlu0 %171
    %v173 = vsub.f32 %v169, %v172
    %v174 = vmul.f32 %v173, 1.442695
    %v175 = vpow.pop %v174
    %v176 = vsel %vm47, %v175, 0.0
    %177 = vadd.xlane.f32.xlu0 %v176
    %v178 = vpop.xlane.xlu0 %177
    %v179 = vrcp.pop %v178
    %v180 = vmul.f32 %v175, %v179
    %v181 = vadd.f32 %v142, %v180
    %v182 = vmul.f32 %v181, 0.5
    %v183 = vlog2.pop %v103
    %v184 = vmul.f32 %v183, 0.6931472
    %v185 = vlog2.pop %v182
    %v186 = vmul.f32 %v185, 0.6931472
    %v187 = vsel %vm23, %v12, -inf
    %188 = vmax.xlane.f32.xlu0 %v187
    %v189 = vpop.xlane.xlu0 %188
    %v190 = vsub.f32 %v12, %v189
    %v191 = vmul.f32 %v190, 1.442695
    %v192 = vpow.pop %v191
    %v193 = vsel %vm23, %v192, 0.0
    %194 = vadd.xlane.f32.xlu0 %v193
    %v195 = vpop.xlane.xlu0 %194
    %v196 = vlog2.pop %v195
    %v197 = vmul.f32 %v196, 0.6931472
    %v198 = vsub.f32 %v190, %v197
    %v199 = vsel %vm23, %v198, 0.0
    %v200 = vrot.slane %v199, 4
    %v201 = vadd.f32 %v199, %v200
    %v202 = vrot.slane %v201, 2
    %v203 = vadd.f32 %v201, %v202
    %v204 = vrot.slane %v203, 1
    %v205 = vadd.f32 %v203, %v204
    %vm206 = vcmask 130052
    %v207 = vsel %vm206, %v12, -inf
    %208 = vmax.xlane.f32.xlu0 %v207
    %v209 = vpop.xlane.xlu0 %208
    %v210 = vsub.f32 %v12, %v209
    %v211 = vmul.f32 %v210, 1.442695
    %v212 = vpow.pop %v211
    %v213 = vsel %vm206, %v212, 0.0
    %214 = vadd.xlane.f32.xlu0 %v213
    %v215 = vpop.xlane.xlu0 %214
    %v216 = vlog2.pop %v215
    %v217 = vmul.f32 %v216, 0.6931472
    %v218 = vsub.f32 %v210, %v217
    %v220 = vrot.slane %v218, 4
    %v222 = vsel %vm23, %v220, 0.0
    %v223 = vrot.slane %v222, 4
    %v224 = vadd.f32 %v222, %v223
    %v225 = vrot.slane %v224, 2
    %v226 = vadd.f32 %v224, %v225
    %v227 = vrot.slane %v226, 1
    %v228 = vadd.f32 %v226, %v227
    %v229 = vmul.f32 %v103, %v184
    %vm230 = vcmask 122880
    %v231 = vsel %vm230, %v229, 0.0
    %232 = vadd.xlane.f32.xlu0 %v231
    %v233 = vpop.xlane.xlu0 %232
    %v234 = vrot.slane %v233, 4
    %v235 = vadd.f32 %v233, %v234
    %v236 = vrot.slane %v235, 2
    %v237 = vadd.f32 %v235, %v236
    %v238 = vrot.slane %v237, 1
    %v239 = vadd.f32 %v237, %v238
    %s240 = vtos %v239
    %v241 = vmul.f32 %v182, %v186
    %v242 = vsel %vm230, %v241, 0.0
    %243 = vadd.xlane.f32.xlu0 %v242
    %v244 = vpop.xlane.xlu0 %243
    %v245 = vrot.slane %v244, 4
    %v246 = vadd.f32 %v244, %v245
    %v247 = vrot.slane %v246, 2
    %v248 = vadd.f32 %v246, %v247
    %v249 = vrot.slane %v248, 1
    %v250 = vadd.f32 %v248, %v249
    %s251 = vtos %v250
    %v252 = vmul.f32 %v103, %v205
    %v253 = vsel %vm230, %v252, 0.0
    %254 = vadd.xlane.f32.xlu0 %v253
    %v255 = vpop.xlane.xlu0 %254
    %v256 = vrot.slane %v255, 4
    %v257 = vadd.f32 %v255, %v256
    %v258 = vrot.slane %v257, 2
    %v259 = vadd.f32 %v257, %v258
    %v260 = vrot.slane %v259, 1
    %v261 = vadd.f32 %v259, %v260
    %s262 = vtos %v261
    %s263 = smul.f32 %s262, 0.25
    %s264 = ssub.f32 %s240, %s263
    %v265 = vmul.f32 %v182, %v205
    %v266 = vsel %vm230, %v265, 0.0
    %267 = vadd.xlane.f32.xlu0 %v266
    %v268 = vpop.xlane.xlu0 %267
    %v269 = vrot.slane %v268, 4
    %v270 = vadd.f32 %v268, %v269
    %v271 = vrot.slane %v270, 2
    %v272 = vadd.f32 %v270, %v271
    %v273 = vrot.slane %v272, 1
    %v274 = vadd.f32 %v272, %v273
    %s275 = vtos %v274
    %s276 = smul.f32 %s275, 0.25
    %s277 = ssub.f32 %s251, %s276
    %v278 = vmul.f32 %v182, %v228
    %v279 = vsel %vm230, %v278, 0.0
    %280 = vadd.xlane.f32.xlu0 %v279
    %v281 = vpop.xlane.xlu0 %280
    %v282 = vrot.slane %v281, 4
    %v283 = vadd.f32 %v281, %v282
    %v284 = vrot.slane %v283, 2
    %v285 = vadd.f32 %v283, %v284
    %v286 = vrot.slane %v285, 1
    %v287 = vadd.f32 %v285, %v286
    %s288 = vtos %v287
    %s289 = smul.f32 %s288, 0.25
    %s290 = ssub.f32 %s251, %s289
    %v291 = vmul.f32 %v103, %v228
    %v292 = vsel %vm230, %v291, 0.0
    %293 = vadd.xlane.f32.xlu0 %v292
    %v294 = vpop.xlane.xlu0 %293
    %v295 = vrot.slane %v294, 4
    %v296 = vadd.f32 %v294, %v295
    %v297 = vrot.slane %v296, 2
    %v298 = vadd.f32 %v296, %v297
    %v299 = vrot.slane %v298, 1
    %v300 = vadd.f32 %v298, %v299
    %s301 = vtos %v300
    %s302 = smul.f32 %s301, 0.25
    %s303 = ssub.f32 %s240, %s302
    %s304 = sadd.f32 %s264, 0.5
    %s305 = ssub.f32 %s304, %s277
    %s306 = smax.f32 %s305, 0.0
    %s307 = sadd.f32 %s290, 0.5
    %s308 = ssub.f32 %s307, %s303
    %s309 = smax.f32 %s308, 0.0
    %s310 = sadd.f32 %s306, %s309
    %s311 = scalar_lea.smem [#allocation2], 0
    %312 = sst [smem:[%s311]] %s310
    // Predicated region
    $region10: #{tpu_custom_call.1} parent=1 // pred_check
      _
    $region11: #{tpu_custom_call.1} parent=1 // pred_check_branch
      %314 = sbr.rel (0) target = $region13
    $region12: #{tpu_custom_call.1} parent=1 // pred_region
      %s316 = ssub.s32 16, 16
      %317 = vsyncadd [#allocation3], %s316
      %320 = dma.smem_to_hbm [#allocation2], 16, %s2, [#allocation3]
    $region13: #{tpu_custom_call.1} parent=1 // pred_fallthru
      _
    // Predicated region
    $region14: #{tpu_custom_call.1} parent=1 // pred_check
      _
    $region15: #{tpu_custom_call.1} parent=1 // pred_check_branch
      %322 = sbr.rel (0) target = $region17
    $region16: #{tpu_custom_call.1} parent=1 // pred_region
      %323 = dma.done [#allocation3], 16
    $region17: #{tpu_custom_call.1} parent=1 // pred_fallthru
      _
    %324 = sfence
    %325 = vsyncpa [#allocation3], 1

</llo_original>
